<compile_context>
chip_gen: v7x
topology: tpu7x:2x2x1
jax: 0.10.0
libtpu: 0.0.40
codegen_flags: <defaults>
</compile_context>

<pallas_src>
import jax
import jax.numpy as jnp
import numpy as np
from jax.experimental import pallas as pl
from jax.experimental.pallas import tpu as pltpu

LANE = 128


# --------------------------------------------------------------------------------------
# Weighted-sum kernel: out = sum_k x_k * attn_k, attn broadcast over the spatial lanes.
# --------------------------------------------------------------------------------------
def _make_wsum_kernel(height):
    def kernel(*refs):
        # refs: x_0..x_{h-1} (bc_t, hw_t) input dtype
        #       a_0..a_{h-1} (bc_t, 1)    f32
        #       o            (bc_t, hw_t) input dtype
        x_refs = refs[:height]
        a_refs = refs[height:2 * height]
        o_ref = refs[2 * height]
        acc = x_refs[0][...].astype(jnp.float32) * a_refs[0][...]
        for k in range(1, height):
            acc = acc + x_refs[k][...].astype(jnp.float32) * a_refs[k][...]
        o_ref[...] = acc.astype(o_ref.dtype)
    return kernel


# --------------------------------------------------------------------------------------
# Tile-size helpers (trace-time Python ints only).
# --------------------------------------------------------------------------------------
def _largest_divisor_multiple(total, quantum, cap):
    """Largest d <= cap with d % quantum == 0 and total % d == 0 (None if none)."""
    cap = min(cap, total)
    cap = (cap // quantum) * quantum
    d = cap
    while d >= quantum:
        if total % d == 0:
            return d
        d -= quantum
    return None


def _pick_sublane_tile(rows, sub, max_rows):
    """Sublane (second-minor) block size: multiple of `sub` dividing `rows`, or full."""
    if rows % sub != 0 or rows <= max_rows:
        return rows                      # full-extent block is always legal
    d = _largest_divisor_multiple(rows, sub, max_rows)
    return d if d is not None else rows


def _pick_lane_tile(hw, max_lanes):
    """Lane block size + (possibly) padded extent. Prefers no padding."""
    max_lanes = max(LANE, max_lanes)
    if hw % LANE == 0:
        return _largest_divisor_multiple(hw, LANE, max_lanes), hw   # >=128 always found
    if hw <= max_lanes:
        return hw, hw                    # full-extent lane block, no pad needed
    # TODO(synk): pad only the ragged final tile (in-kernel mask) instead of jnp.pad.
    hw_pad = ((hw + LANE - 1) // LANE) * LANE
    return _largest_divisor_multiple(hw_pad, LANE, max_lanes), hw_pad


# --------------------------------------------------------------------------------------
# Forward
# --------------------------------------------------------------------------------------
def mfm_forward(in_feats, w1, w2, height):
    """in_feats: list of `height` arrays of shape (B, C, H, W) [NCHW].
    w1: (d, C)        from Conv2d(dim, d, 1, bias=False) weight squeezed.
    w2: (height*C, d) from Conv2d(d, dim*height, 1, bias=False) weight squeezed.
    """
    assert len(in_feats) == height
    B, C, H, W = in_feats[0].shape
    HW = H * W
    BC = B * C
    dtype = in_feats[0].dtype
    itemsize = jnp.dtype(dtype).itemsize

    # ---------- attention path: pool -> MLP -> height-softmax (tiny; left to XLA) ----------
    # sum-of-means == mean-of-sum, so no stacked feats_sum tensor is ever materialized.
    pooled = sum(jnp.mean(f.astype(jnp.float32), axis=(2, 3)) for f in in_feats)      # (B, C)
    h1 = jnp.maximum(pooled @ w1.astype(jnp.float32).T, 0.0)                          # (B, d)
    logits = h1 @ w2.astype(jnp.float32).T                                            # (B, h*C)
    attn = jax.nn.softmax(logits.reshape(B, height, C), axis=1)                       # (B, h, C)
    attn_flat = [attn[:, k, :].reshape(BC, 1) for k in range(height)]                 # h x (BC,1) f32

    # ---------- weighted-sum path (HBM-bound), tiled over (B*C sublane rows, HW lanes) ----------
    x2d = [f.reshape(BC, HW) for f in in_feats]     # free reshape of contiguous NCHW

    # VMEM budget: conservative enough for v7x (64 MiB / TC); bumped on 128 MiB chips.
    try:
        vmem_cap = pltpu.get_tpu_info().vmem_capacity_bytes
    except Exception:
        vmem_cap = 64 * 1024 * 1024
    if vmem_cap >= 128 * 1024 * 1024:
        step_budget, vmem_limit = 24 << 20, 96 << 20        # v5e / v6e
    else:
        step_budget, vmem_limit = 12 << 20, 48 << 20        # v7x-safe

    sub = max(8, 32 // itemsize)                            # 8 for f32, 16 for bf16
    bc_t = _pick_sublane_tile(BC, sub, 512)
    per_lane_bytes = (height + 1) * bc_t * itemsize          # height x-blocks + 1 out block
    max_lanes = (step_budget // per_lane_bytes) // LANE * LANE
    hw_t, HW_pad = _pick_lane_tile(HW, max_lanes)

    if HW_pad != HW:
        x2d = [jnp.pad(x, ((0, 0), (0, HW_pad - HW))) for x in x2d]

    n_bc = BC // bc_t
    n_hw = HW_pad // hw_t

    # Re-derive the VMEM limit from the actual (double-buffered) block bytes so that a
    # 128-lane floor on tiny budgets can never exceed the compiler's scoped limit.
    step_bytes = (height + 1) * bc_t * hw_t * itemsize + height * bc_t * 4
    vmem_limit = max(vmem_limit, 2 * step_bytes + (4 << 20))

    x_specs = [pl.BlockSpec((bc_t, hw_t), lambda i, j: (i, j)) for _ in range(height)]
    a_specs = [pl.BlockSpec((bc_t, 1), lambda i, j: (i, 0)) for _ in range(height)]

    out2d = pl.pallas_call(
        _make_wsum_kernel(height),
        out_shape=jax.ShapeDtypeStruct((BC, HW_pad), dtype),
        grid=(n_bc, n_hw),
        in_specs=x_specs + a_specs,
        out_specs=pl.BlockSpec((bc_t, hw_t), lambda i, j: (i, j)),
        compiler_params=pltpu.CompilerParams(
            dimension_semantics=("parallel", "parallel"),
            vmem_limit_bytes=vmem_limit),
    )(*x2d, *attn_flat)

    if HW_pad != HW:
        out2d = out2d[:, :HW]
    return out2d.reshape(B, C, H, W)


def mfm_reference(in_feats, w1, w2, height):
    """Pure-JAX reference mirroring the PyTorch forward."""
    B, C, H, W = in_feats[0].shape
    x = jnp.stack(in_feats, axis=1)                        # (B, h, C, H, W)
    s = jnp.sum(x, axis=1)                                 # (B, C, H, W)
    pooled = jnp.mean(s, axis=(2, 3))                      # (B, C)
    h1 = jnp.maximum(pooled @ w1.T, 0.0)                   # (B, d)
    logits = h1 @ w2.T                                     # (B, h*C)
    attn = jax.nn.softmax(logits.reshape(B, height, C), axis=1)
    return jnp.sum(x * attn[:, :, :, None, None], axis=1)  # (B, C, H, W)


if __name__ == "__main__":
    # Module config (matching MFM(dim=4, height=2, reduction=8))
    dim = 4
    height = 2
    reduction = 8
    d = max(int(dim / reduction), 4)

    B, C, H, W = 2, dim, 16, 16

    key = jax.random.PRNGKey(0)
    k1, k2, kx1, kx2 = jax.random.split(key, 4)

    # Deterministic synthetic parameters (Conv2d 1x1, no bias -> plain matrices)
    w1 = 0.1 * jax.random.normal(k1, (d, C), dtype=jnp.float32)              # Conv2d(dim, d, 1)
    w2 = 0.1 * jax.random.normal(k2, (dim * height, d), dtype=jnp.float32)   # Conv2d(d, dim*height, 1)

    # Two input feature maps (height = 2)
    f0 = jax.random.normal(kx1, (B, C, H, W), dtype=jnp.float32)
    f1 = jax.random.normal(kx2, (B, C, H, W), dtype=jnp.float32)
    in_feats = [f0, f1]

    out = jax.block_until_ready(mfm_forward(in_feats, w1, w2, height))

    ref = mfm_reference(in_feats, w1, w2, height)
    np.testing.assert_allclose(np.asarray(out), np.asarray(ref), rtol=1e-5, atol=1e-5)

    print("KERNEL_OK")
</pallas_src>

<mosaic_0001>
module attributes {stable_mosaic.version = 11 : i64} {
  func.func @kernel(%arg0: i32, %arg1: i32, %arg2: memref<8x256xf32, #tpu.memory_space<vmem>>, %arg3: memref<8x256xf32, #tpu.memory_space<vmem>>, %arg4: memref<8x1xf32, #tpu.memory_space<vmem>>, %arg5: memref<8x1xf32, #tpu.memory_space<vmem>>, %arg6: memref<8x256xf32, #tpu.memory_space<vmem>>) attributes {dimension_semantics = [#tpu.dimension_semantics<parallel>, #tpu.dimension_semantics<parallel>], iteration_bounds = array<i64: 1, 1>, scalar_prefetch = 0 : i64, scratch_operands = 0 : i64, tpu.core_type = #tpu.core_type<tc>, window_params = [{transform_indices = @transform_0, window_bounds = array<i64: 8, 256>}, {transform_indices = @transform_1, window_bounds = array<i64: 8, 256>}, {transform_indices = @transform_2, window_bounds = array<i64: 8, 1>}, {transform_indices = @transform_3, window_bounds = array<i64: 8, 1>}, {transform_indices = @transform_4, window_bounds = array<i64: 8, 256>}]} {
    %c0 = arith.constant 0 : index
    %c0_0 = arith.constant 0 : index
    %0 = vector.load %arg2[%c0, %c0_0] : memref<8x256xf32, #tpu.memory_space<vmem>>, vector<8x256xf32>
    %c0_1 = arith.constant 0 : index
    %c0_2 = arith.constant 0 : index
    %1 = vector.load %arg4[%c0_1, %c0_2] : memref<8x1xf32, #tpu.memory_space<vmem>>, vector<8x1xf32>
    %2 = vector.broadcast %1 : vector<8x1xf32> to vector<8x256xf32>
    %3 = arith.mulf %0, %2 : vector<8x256xf32>
    %c0_3 = arith.constant 0 : index
    %c0_4 = arith.constant 0 : index
    %4 = vector.load %arg3[%c0_3, %c0_4] : memref<8x256xf32, #tpu.memory_space<vmem>>, vector<8x256xf32>
    %c0_5 = arith.constant 0 : index
    %c0_6 = arith.constant 0 : index
    %5 = vector.load %arg5[%c0_5, %c0_6] : memref<8x1xf32, #tpu.memory_space<vmem>>, vector<8x1xf32>
    %6 = vector.broadcast %5 : vector<8x1xf32> to vector<8x256xf32>
    %7 = arith.mulf %4, %6 : vector<8x256xf32>
    %8 = arith.addf %3, %7 : vector<8x256xf32>
    %c0_7 = arith.constant 0 : index
    %c0_8 = arith.constant 0 : index
    %9 = vector.load %arg6[%c0_7, %c0_8] : memref<8x256xf32, #tpu.memory_space<vmem>>, vector<8x256xf32>
    tpu.vector_store %arg6[%c0_7, %c0_8], %8 {strides = array<i32>} : memref<8x256xf32, #tpu.memory_space<vmem>>, vector<8x256xf32>,
    return
  }
  func.func @transform_0(%arg0: i32, %arg1: i32) -> (i32, i32) {
    %c0_i32 = arith.constant 0 : i32
    return %arg0, %arg1 : i32, i32
  }
  func.func @transform_1(%arg0: i32, %arg1: i32) -> (i32, i32) {
    %c0_i32 = arith.constant 0 : i32
    return %arg0, %arg1 : i32, i32
  }
  func.func @transform_2(%arg0: i32, %arg1: i32) -> (i32, i32) {
    %c0_i32 = arith.constant 0 : i32
    %c0_i32_0 = arith.constant 0 : i32
    return %arg0, %c0_i32 : i32, i32
  }
  func.func @transform_3(%arg0: i32, %arg1: i32) -> (i32, i32) {
    %c0_i32 = arith.constant 0 : i32
    %c0_i32_0 = arith.constant 0 : i32
    return %arg0, %c0_i32 : i32, i32
  }
  func.func @transform_4(%arg0: i32, %arg1: i32) -> (i32, i32) {
    %c0_i32 = arith.constant 0 : i32
    return %arg0, %arg1 : i32, i32
  }
}

</mosaic_0001>

<llo_original>
// kernel: tpu_custom_call.1
$region0: #{tpu_custom_call.1}
  #allocation0 [shape = 'u32[]', space=smem, size = 0x4, offset = 0x4, fixed_abs, tag = 'smem constant byte address 0x4 - core index']
  #allocation1 [shape = 'u32[144,128]{1,0:T(1,128)}', space=vmem, size = 0x12000, scoped, tag = 'internal scratch']
  %s0 = inlined_call_operand.vmem [shape: f32[8,256], index: 0, kind: input, shape index: {}]
  %s1 = inlined_call_operand.hbm [shape: f32[8,256], index: 1, kind: input, shape index: {}]
  %s2 = inlined_call_operand.vmem [shape: f32[8,1], index: 2, kind: input, shape index: {}]
  %s3 = inlined_call_operand.vmem [shape: f32[8,1], index: 3, kind: input, shape index: {}]
  %s4 = inlined_call_operand.hbm [shape: f32[8,256], index: 4, kind: output, shape index: {}]
  %s5 = sld [smem:[#allocation0]]
  $region30: #{tpu_custom_call.1} parent=0
    _
  %s7 = ssub.s32 1, %s5
  %s8 = scalar_select 0, %s7, %s5
  $region1: #{tpu_custom_call.1} parent=0
    #allocation2 [shape = 'u8[8192]{0}', space=vmem, size = 0x2000, scoped, tag = 'input window, operand 1, single buffered']
    #allocation3 [shape = 's32[1]{0}', space=sflag, size = 0x4, scoped, tag = 'scoped memory for tpu_custom_call.1']
    #allocation4 [shape = 's32[1]{0}', space=sflag, size = 0x4, scoped, tag = 'scoped memory for tpu_custom_call.1']
    #allocation5 [shape = 'u8[8192]{0}', space=vmem, size = 0x2000, scoped, tag = 'output window, operand 0, single buffered']
    %9 = vsyncpa [#allocation3], 0
    %10 = vsyncpa [#allocation4], 0
    // Predicated region
    $region2: #{tpu_custom_call.1} parent=1 // pred_check
      _
    $region3: #{tpu_custom_call.1} parent=1 // pred_check_branch
      %12 = sbr.rel (0) target = $region5
    $region4: #{tpu_custom_call.1} parent=1 // pred_region
      _
    $region5: #{tpu_custom_call.1} parent=1 // pred_fallthru
      _
    // Predicated region
    $region6: #{tpu_custom_call.1} parent=1 // pred_check
      _
    $region7: #{tpu_custom_call.1} parent=1 // pred_check_branch
      %14 = sbr.rel (0) target = $region9
    $region8: #{tpu_custom_call.1} parent=1 // pred_region
      %s16 = ssub.s32 256, 256
      %17 = vsyncadd [#allocation3], %s16
      %s19 = sshll.u32 [#allocation2], 4
      %s20 = int_to_ptr.vmem [resolvable:$true] %s19
      %22 = dma.hbm_to_vmem [thread:$0]  %s1, 256, %s20, [#allocation3]
    $region9: #{tpu_custom_call.1} parent=1 // pred_fallthru
      _
    // Predicated region
    $region10: #{tpu_custom_call.1} parent=1 // pred_check
      _
    $region11: #{tpu_custom_call.1} parent=1 // pred_check_branch
      %24 = sbr.rel (0) target = $region13
    $region12: #{tpu_custom_call.1} parent=1 // pred_region
      _
    $region13: #{tpu_custom_call.1} parent=1 // pred_fallthru
      _
    // Predicated region
    $region14: #{tpu_custom_call.1} parent=1 // pred_check
      _
    $region15: #{tpu_custom_call.1} parent=1 // pred_check_branch
      %26 = sbr.rel (0) target = $region17
    $region16: #{tpu_custom_call.1} parent=1 // pred_region
      _
    $region17: #{tpu_custom_call.1} parent=1 // pred_fallthru
      _
    // Predicated region
    $region18: #{tpu_custom_call.1} parent=1 // pred_check
      _
    $region19: #{tpu_custom_call.1} parent=1 // pred_check_branch
      %28 = sbr.rel (0) target = $region21
    $region20: #{tpu_custom_call.1} parent=1 // pred_region
      %29 = dma.done [#allocation3], 256
    $region21: #{tpu_custom_call.1} parent=1 // pred_fallthru
      _
    %v30 = vld [vmem:[%s0] sm:$0xff]
    %v31 = vld [vmem:[%s0 + $0x8] sm:$0xff]
    %v32 = vld [vmem:[%s2] sm:$0xff]
    %34 = vset.pattern.permute.xlu0 0
    %35 = vperm.xlu0 %34, %v32
    %v36 = vpop.permute.xlu0 %35
    %v38 = vmul.f32 %v30, %v36
    %v39 = vmul.f32 %v31, %v36
    %v40 = vld [vmem:[#allocation2] sm:$0xff]
    %v41 = vld [vmem:[#allocation2 + $0x8] sm:$0xff]
    %v42 = vld [vmem:[%s3] sm:$0xff]
    %44 = vset.pattern.permute.xlu0 0
    %45 = vperm.xlu0 %44, %v42
    %v46 = vpop.permute.xlu0 %45
    %v48 = vmul.f32 %v40, %v46
    %v49 = vmul.f32 %v41, %v46
    %v50 = vadd.f32 %v38, %v48
    %v51 = vadd.f32 %v39, %v49
    %52 = vst [vmem:[#allocation5] sm:$0xff] %v50
    %53 = vst [vmem:[#allocation5 + $0x8] sm:$0xff] %v51
    // Predicated region
    $region22: #{tpu_custom_call.1} parent=1 // pred_check
      _
    $region23: #{tpu_custom_call.1} parent=1 // pred_check_branch
      %55 = sbr.rel (0) target = $region25
    $region24: #{tpu_custom_call.1} parent=1 // pred_region
      %s57 = ssub.s32 256, 256
      %58 = vsyncadd [#allocation4], %s57
      %s60 = sshll.u32 [#allocation5], 4
      %s61 = int_to_ptr.vmem [resolvable:$true] %s60
      %63 = dma.vmem_to_hbm [thread:$0]  %s61, 256, %s4, [#allocation4]
    $region25: #{tpu_custom_call.1} parent=1 // pred_fallthru
      _
    // Predicated region
    $region26: #{tpu_custom_call.1} parent=1 // pred_check
      _
    $region27: #{tpu_custom_call.1} parent=1 // pred_check_branch
      %65 = sbr.rel (0) target = $region29
    $region28: #{tpu_custom_call.1} parent=1 // pred_region
      %66 = dma.done [#allocation4], 256
    $region29: #{tpu_custom_call.1} parent=1 // pred_fallthru
      _
    %67 = vsyncpa [#allocation3], 1
    %68 = vsyncpa [#allocation4], 1

</llo_original>
